<compile_context>
chip_gen: v5e
topology: v5e:2x2
jax: 0.10.0
libtpu: 0.0.40
codegen_flags: <defaults>
</compile_context>

<pallas_src>
import functools

import jax
import jax.numpy as jnp
from jax.experimental import pallas as pl
from jax.experimental.pallas import tpu as pltpu


# ---------------------------------------------------------------------------
# roll-convention probe (cached: one tiny launch per process, never in the
# steady-state path).  pltpu.roll is expected to match jnp.roll semantics.
# ---------------------------------------------------------------------------

def _roll_probe_kernel(x_ref, o_ref):
    o_ref[...] = pltpu.roll(x_ref[...], 1, 1)


@functools.lru_cache(maxsize=1)
def detect_roll_sign():
    """-1 if pltpu.roll follows jnp.roll semantics (out[i] = in[i - shift])."""
    x = jnp.arange(8 * 128, dtype=jnp.float32).reshape(8, 128)
    y = pl.pallas_call(
        _roll_probe_kernel,
        out_shape=jax.ShapeDtypeStruct((8, 128), jnp.float32),
    )(x)
    return -1 if float(y[0, 0]) == 127.0 else 1


# ---------------------------------------------------------------------------
# In-kernel building blocks (VMEM ref -> VMEM ref, 8-channel chunks)
# ---------------------------------------------------------------------------

_MXU_MIN_DIM = 64  # pointwise contraction moves to the MXU above this size


def _dw3x3_relu(src, dst, w_ref, b_ref, c, hw, shifts, masks):
    """Per-channel 3x3 conv (pad=1, stride=1) + ReLU via lane rolls + masks."""
    for c0 in range(0, c, 8):
        cs = min(8, c - c0)
        xch = src[c0:c0 + cs, :]                                   # (cs, hw)
        acc = jnp.broadcast_to(b_ref[c0:c0 + cs, :], (cs, hw))
        for k in range(9):
            s = shifts[k]
            t = xch if s == 0 else pltpu.roll(xch, s, 1) * masks[k]
            acc = acc + t * w_ref[c0:c0 + cs, k:k + 1]             # per-ch FMA
        dst[c0:c0 + cs, :] = jnp.maximum(acc, 0.0)


def _pw_relu(src, dst, w_ref, b_ref, cin, cout, hw):
    """1x1 conv + ReLU.  MXU matmul for large contractions, else VPU FMAs."""
    if min(cin, cout) >= _MXU_MIN_DIM:
        y = jnp.dot(w_ref[...], src[0:cin, :],
                    preferred_element_type=jnp.float32) + b_ref[...]
        dst[0:cout, :] = jnp.maximum(y, 0.0)
        return
    for c0 in range(0, cout, 8):
        cs = min(8, cout - c0)
        acc = jnp.broadcast_to(b_ref[c0:c0 + cs, :], (cs, hw))
        for ci in range(cin):
            xrow = jnp.broadcast_to(src[ci:ci + 1, :], (cs, hw))
            acc = acc + xrow * w_ref[c0:c0 + cs, ci:ci + 1]
        dst[c0:c0 + cs, :] = jnp.maximum(acc, 0.0)


# ---------------------------------------------------------------------------
# The fused kernel (one image per grid step)
# ---------------------------------------------------------------------------

def _repmobile_kernel(x_ref,
                      w1_ref, b1_ref,
                      w2d_ref, b2d_ref, w2p_ref, b2p_ref,
                      w3d_ref, b3d_ref, w3p_ref, b3p_ref,
                      w4d_ref, b4d_ref, w4p_ref, b4p_ref,
                      fcw_ref, fcb_ref,
                      o_ref,
                      act_a, act_b,
                      *, height, width, channels, taps, shifts):
    hw = height * width
    c1, c2, c3, c4 = channels

    # ---- boundary masks generated in-kernel (VPU iota + compares) ----------
    f = jax.lax.broadcasted_iota(jnp.int32, (1, hw), 1)
    if (width & (width - 1)) == 0:                      # power-of-two fast path
        xx = f & (width - 1)
        yy = f >> (width.bit_length() - 1)
    else:
        yy = jnp.floor(f.astype(jnp.float32) / float(width)).astype(jnp.int32)
        xx = f - yy * width
    masks = []
    for dy, dx in taps:
        if dy == 0 and dx == 0:
            masks.append(None)                          # centre tap: no mask
        else:
            ok = ((yy + dy >= 0) & (yy + dy < height) &
                  (xx + dx >= 0) & (xx + dx < width))
            masks.append(jnp.where(ok, 1.0, 0.0).astype(jnp.float32))

    # ---- stage1: 1 -> c1, 3x3, pad=1 (single input channel: roll once) -----
    x0 = x_ref[0]                                                  # (1, hw)
    tapped = []
    for k in range(9):
        s = shifts[k]
        tapped.append(x0 if s == 0 else pltpu.roll(x0, s, 1) * masks[k])
    for c0 in range(0, c1, 8):
        cs = min(8, c1 - c0)
        acc = jnp.broadcast_to(b1_ref[c0:c0 + cs, :], (cs, hw))
        for k in range(9):
            acc = acc + (jnp.broadcast_to(tapped[k], (cs, hw))
                         * w1_ref[c0:c0 + cs, k:k + 1])
        act_a[c0:c0 + cs, :] = jnp.maximum(acc, 0.0)

    # ---- stages 2..4: depthwise 3x3 + pointwise 1x1 (BN/branches pre-fused)
    _dw3x3_relu(act_a, act_b, w2d_ref, b2d_ref, c1, hw, shifts, masks)
    _pw_relu(act_b, act_a, w2p_ref, b2p_ref, c1, c2, hw)
    _dw3x3_relu(act_a, act_b, w3d_ref, b3d_ref, c2, hw, shifts, masks)
    _pw_relu(act_b, act_a, w3p_ref, b3p_ref, c2, c3, hw)
    _dw3x3_relu(act_a, act_b, w4d_ref, b4d_ref, c3, hw, shifts, masks)
    _pw_relu(act_b, act_a, w4p_ref, b4p_ref, c3, c4, hw)

    # ---- head: global average pool + linear, single store ------------------
    feat = act_a[0:c4, :]                                          # (c4, hw)
    pooled = jnp.sum(feat, axis=1, keepdims=True) * (1.0 / hw)     # (c4, 1)
    logits = jnp.sum(pooled * fcw_ref[...], axis=0, keepdims=True) + fcb_ref[...]
    o_ref[0] = logits                                              # (1, K)


# ---------------------------------------------------------------------------
# Host-side wrapper
# ---------------------------------------------------------------------------

_WEIGHT_NAMES = ("stage1_w", "stage1_b",
                 "stage2_dw_w", "stage2_dw_b", "stage2_pw_w", "stage2_pw_b",
                 "stage3_dw_w", "stage3_dw_b", "stage3_pw_w", "stage3_pw_b",
                 "stage4_dw_w", "stage4_dw_b", "stage4_pw_w", "stage4_pw_b",
                 "fc_w", "fc_b")


def repmobile_forward(x_nchw, params, *, roll_sign=-1):
    batch, cin, height, width = x_nchw.shape
    assert cin == 1, "RepMobile stage1 expects a single input channel"
    hw = height * width
    assert hw % 128 == 0, "H*W must be lane-aligned (pad spatially otherwise)"

    taps = tuple((ky - 1, kx - 1) for ky in range(3) for kx in range(3))
    # want out[f] = in[f + dy*W + dx]; shift sign depends on roll convention
    shifts = tuple(int((roll_sign * (dy * width + dx)) % hw) for dy, dx in taps)

    c1 = params["stage1_w"].shape[0]
    c2 = params["stage2_pw_w"].shape[0]
    c3 = params["stage3_pw_w"].shape[0]
    c4 = params["stage4_pw_w"].shape[0]
    channels = (c1, c2, c3, c4)
    c_max = max(channels)
    num_classes = params["fc_b"].shape[-1]

    x3 = x_nchw[:, 0].reshape(batch, 1, hw).astype(jnp.float32)
    weights = [params[n] for n in _WEIGHT_NAMES]

    kernel = functools.partial(_repmobile_kernel, height=height, width=width,
                               channels=channels, taps=taps, shifts=shifts)

    in_specs = [pl.BlockSpec((1, 1, hw), lambda b: (b, 0, 0))]
    in_specs += [pl.BlockSpec(w.shape, lambda b: (0, 0)) for w in weights]
    out_spec = pl.BlockSpec((1, 1, num_classes), lambda b: (b, 0, 0))

    macs = batch * hw * (9 * c1 + 9 * c1 + c1 * c2 + 9 * c2 + c2 * c3
                         + 9 * c3 + c3 * c4) + batch * c4 * num_classes
    bytes_accessed = (batch * hw * 4
                      + sum(int(w.size) * 4 for w in weights)
                      + batch * num_classes * 4)

    out = pl.pallas_call(
        kernel,
        out_shape=jax.ShapeDtypeStruct((batch, 1, num_classes), jnp.float32),
        grid=(batch,),
        in_specs=in_specs,
        out_specs=out_spec,
        scratch_shapes=[pltpu.VMEM((c_max, hw), jnp.float32),
                        pltpu.VMEM((c_max, hw), jnp.float32)],
        compiler_params=pltpu.CompilerParams(
            dimension_semantics=("parallel",)),
        cost_estimate=pl.CostEstimate(flops=2 * macs, transcendentals=0,
                                      bytes_accessed=bytes_accessed),
    )(x3, *weights)
    return out.reshape(batch, num_classes)


# ---------------------------------------------------------------------------
# Deterministic parameter construction + BN / multi-branch fusion (glue)
# ---------------------------------------------------------------------------

def _init_bn(key, c):
    k1, k2, k3, k4 = jax.random.split(key, 4)
    gamma = jax.random.uniform(k1, (c,), jnp.float32, 0.5, 1.5)
    beta = jax.random.normal(k2, (c,), jnp.float32) * 0.1
    mean = jax.random.normal(k3, (c,), jnp.float32) * 0.1
    var = jax.random.uniform(k4, (c,), jnp.float32, 0.5, 1.5)
    return gamma, beta, mean, var


def _bn_scale_shift(bn, eps=1e-5):
    gamma, beta, mean, var = bn
    t = gamma / jnp.sqrt(var + eps)
    return t, beta - mean * t


def _conv_init(key, shape, fan_in):
    bound = 1.0 / float(fan_in) ** 0.5
    return jax.random.uniform(key, shape, jnp.float32, -bound, bound)


def _fuse_stage1(key, cout):
    # layer(1, cout, 3, 1, 1): Conv2d(bias=True) + BN + ReLU
    k_w, k_b, k_bn = jax.random.split(key, 3)
    w = _conv_init(k_w, (cout, 1, 3, 3), 9)
    b = _conv_init(k_b, (cout,), 9)
    t, sh = _bn_scale_shift(_init_bn(k_bn, cout))
    w_f = (w[:, 0] * t[:, None, None]).reshape(cout, 9)            # (cout, 9)
    b_f = t * b + sh
    return w_f, b_f[:, None]                                       # (c,9),(c,1)


def _fuse_depth_block(key, c):
    # RepMobileBlock dw: skip BN + 1x1(groups=c)+BN scale branch + 3x (conv+BN)
    keys = jax.random.split(key, 9)
    t_id, sh_id = _bn_scale_shift(_init_bn(keys[0], c))             # rbr_skip
    w_sc = _conv_init(keys[1], (c,), 1)                             # rbr_scale
    t_sc, sh_sc = _bn_scale_shift(_init_bn(keys[2], c))
    k_dw = jnp.zeros((c, 9), jnp.float32)
    bias = sh_id + sh_sc
    for i in range(3):                                              # 3 branches
        wb = _conv_init(keys[3 + 2 * i], (c, 1, 3, 3), 9)
        t_b, sh_b = _bn_scale_shift(_init_bn(keys[4 + 2 * i], c))
        k_dw = k_dw + (wb[:, 0] * t_b[:, None, None]).reshape(c, 9)
        bias = bias + sh_b
    # identity & 1x1-scale branches contribute only at the centre tap (k = 4)
    k_dw = k_dw.at[:, 4].add(t_sc * w_sc + t_id)
    return k_dw, bias[:, None]                                      # (c,9),(c,1)


def _fuse_point_block(key, cin, cout):
    # RepMobileBlock pw: 1x1, no skip (cin != cout), no scale; 3x (conv+BN)
    keys = jax.random.split(key, 6)
    w = jnp.zeros((cout, cin), jnp.float32)
    bias = jnp.zeros((cout,), jnp.float32)
    for i in range(3):
        wb = _conv_init(keys[2 * i], (cout, cin), cin)
        t_b, sh_b = _bn_scale_shift(_init_bn(keys[2 * i + 1], cout))
        w = w + wb * t_b[:, None]
        bias = bias + sh_b
    return w, bias[:, None]                                  # (cout,cin),(cout,1)


def build_params(key, c1, c2, c3, c4, num_classes):
    keys = jax.random.split(key, 9)
    params = {}
    params["stage1_w"], params["stage1_b"] = _fuse_stage1(keys[0], c1)
    for i, (ci, co) in enumerate([(c1, c2), (c2, c3), (c3, c4)]):
        s = f"stage{i + 2}"
        params[f"{s}_dw_w"], params[f"{s}_dw_b"] = _fuse_depth_block(keys[1 + 2 * i], ci)
        params[f"{s}_pw_w"], params[f"{s}_pw_b"] = _fuse_point_block(keys[2 + 2 * i], ci, co)
    fc_w = _conv_init(keys[7], (num_classes, c4), c4)
    fc_b = _conv_init(keys[8], (num_classes,), c4)
    params["fc_w"] = fc_w.T                                         # (c4, K)
    params["fc_b"] = fc_b[None, :]                                  # (1, K)
    return params


# ---------------------------------------------------------------------------
# Pure-JAX reference (NHWC, padded-slice convs) for a correctness check
# ---------------------------------------------------------------------------

def repmobile_reference(x_nchw, params):
    x = jnp.transpose(x_nchw, (0, 2, 3, 1)).astype(jnp.float32)     # NCHW->NHWC

    def conv3x3_relu(x, w9, b):
        n, h, w, _ = x.shape
        xp = jnp.pad(x, ((0, 0), (1, 1), (1, 1), (0, 0)))
        c = w9.shape[0]
        acc = jnp.zeros((n, h, w, c), jnp.float32)
        for ky in range(3):
            for kx in range(3):
                acc = acc + xp[:, ky:ky + h, kx:kx + w, :] * w9[:, ky * 3 + kx]
        return jnp.maximum(acc + b[:, 0], 0.0)

    def pw_relu(x, wp, b):
        y = jnp.einsum("nhwc,dc->nhwd", x, wp) + b[:, 0]
        return jnp.maximum(y, 0.0)

    x = conv3x3_relu(x, params["stage1_w"], params["stage1_b"])
    for s in ("stage2", "stage3", "stage4"):
        x = conv3x3_relu(x, params[f"{s}_dw_w"], params[f"{s}_dw_b"])
        x = pw_relu(x, params[f"{s}_pw_w"], params[f"{s}_pw_b"])
    pooled = jnp.mean(x, axis=(1, 2))                               # (N, C4)
    return pooled @ params["fc_w"] + params["fc_b"][0]


# ---------------------------------------------------------------------------

if __name__ == "__main__":
    key = jax.random.PRNGKey(0)
    kx, kp = jax.random.split(key)
    # compress_rate = 1/16 -> channels 4, 8, 16, 32; num_classes = 10
    c1, c2, c3, c4, num_classes = 4, 8, 16, 32, 10
    params = build_params(kp, c1, c2, c3, c4, num_classes)
    x = jax.random.normal(kx, (2, 1, 16, 16), jnp.float32)          # NCHW, 1 ch

    sign = detect_roll_sign()                                       # probed once
    fwd = jax.jit(functools.partial(repmobile_forward, roll_sign=sign))
    out = fwd(x, params)
    jax.block_until_ready(out)
    assert out.shape == (2, num_classes)

    ref = repmobile_reference(x, params)
    err = float(jnp.max(jnp.abs(out - ref)))
    assert err < 1e-3, f"kernel vs reference mismatch: max|diff| = {err}"
    print("KERNEL_OK")
</pallas_src>

<mosaic_0001>
module attributes {stable_mosaic.version = 11 : i64} {
  func.func @_roll_probe_kernel(%arg0: memref<8x128xf32, #tpu.memory_space<vmem>>, %arg1: memref<8x128xf32, #tpu.memory_space<vmem>>) attributes {dimension_semantics = [], scalar_prefetch = 0 : i64, scratch_operands = 0 : i64, tpu.core_type = #tpu.core_type<tc>} {
    %c0 = arith.constant 0 : index
    %c0_0 = arith.constant 0 : index
    %0 = vector.load %arg0[%c0, %c0_0] : memref<8x128xf32, #tpu.memory_space<vmem>>, vector<8x128xf32>
    %c1_i32 = arith.constant 1 : i32
    %1 = tpu.dynamic_rotate %0 by %c1_i32 dim 1 : vector<8x128xf32>, i32 -> vector<8x128xf32>
    %c0_1 = arith.constant 0 : index
    %c0_2 = arith.constant 0 : index
    %2 = vector.load %arg1[%c0_1, %c0_2] : memref<8x128xf32, #tpu.memory_space<vmem>>, vector<8x128xf32>
    tpu.vector_store %arg1[%c0_1, %c0_2], %1 {strides = array<i32>} : memref<8x128xf32, #tpu.memory_space<vmem>>, vector<8x128xf32>,
    return
  }
}

</mosaic_0001>

<llo_original>
// kernel: tpu_custom_call.1
$region0: #{tpu_custom_call.1}
  #allocation0 [shape = 'u32[]', space=smem, size = 0x4, offset = 0x4, fixed_abs, tag = 'smem constant byte address 0x4 - core index']
  #allocation1 [shape = 'u32[72,128]{1,0:T(1,128)}', space=vmem, size = 0x9000, scoped, tag = 'internal scratch']
  %s0 = inlined_call_operand.hbm [shape: f32[8,128], index: 0, kind: input, shape index: {}]
  %s1 = inlined_call_operand.hbm [shape: f32[8,128], index: 1, kind: output, shape index: {}]
  %s2 = sld [smem:[#allocation0]]
  $region18: #{tpu_custom_call.1} parent=0
    _
  %s4 = ssub.s32 1, %s2
  %s5 = scalar_select 0, %s4, %s2
  $region1: #{tpu_custom_call.1} parent=0
    #allocation2 [shape = 'u8[4096]{0}', space=vmem, size = 0x1000, scoped, tag = 'input window, operand 0, single buffered']
    #allocation3 [shape = 's32[1]{0}', space=sflag, size = 0x4, scoped, tag = 'scoped memory for tpu_custom_call.1']
    #allocation4 [shape = 's32[1]{0}', space=sflag, size = 0x4, scoped, tag = 'scoped memory for tpu_custom_call.1']
    #allocation5 [shape = 'u8[4096]{0}', space=vmem, size = 0x1000, scoped, tag = 'output window, operand 0, single buffered']
    %6 = vsyncpa [#allocation3], 0
    %7 = vsyncpa [#allocation4], 0
    // Predicated region
    $region2: #{tpu_custom_call.1} parent=1 // pred_check
      _
    $region3: #{tpu_custom_call.1} parent=1 // pred_check_branch
      %9 = sbr.rel (0) target = $region5
    $region4: #{tpu_custom_call.1} parent=1 // pred_region
      %11 = vsyncadd [#allocation3], 0
      %s13 = sshll.u32 %s0, 4
      %s14 = int_to_ptr.hbm [resolvable:$true] %s13
      %s15 = sshll.u32 [#allocation2], 4
      %s16 = int_to_ptr.vmem [resolvable:$true] %s15
      %18 = dma.hbm_to_vmem [thread:$0]  %s14, 128, %s16, [#allocation3]
    $region5: #{tpu_custom_call.1} parent=1 // pred_fallthru
      _
    // Predicated region
    $region6: #{tpu_custom_call.1} parent=1 // pred_check
      _
    $region7: #{tpu_custom_call.1} parent=1 // pred_check_branch
      %20 = sbr.rel (0) target = $region9
    $region8: #{tpu_custom_call.1} parent=1 // pred_region
      %22 = dma.done [#allocation3], 128
    $region9: #{tpu_custom_call.1} parent=1 // pred_fallthru
      _
    %v23 = vld [vmem:[#allocation2] sm:$0xff]
    %24 = vrot.lane.b32.xlu0 %v23, 1
    %v25 = vpop.permute.xlu0 %24
    %26 = vst [vmem:[#allocation5] sm:$0xff] %v25
    // Predicated region
    $region10: #{tpu_custom_call.1} parent=1 // pred_check
      _
    $region11: #{tpu_custom_call.1} parent=1 // pred_check_branch
      %28 = sbr.rel (0) target = $region13
    $region12: #{tpu_custom_call.1} parent=1 // pred_region
      %30 = vsyncadd [#allocation4], 0
      %s32 = sshll.u32 [#allocation5], 4
      %s33 = int_to_ptr.vmem [resolvable:$true] %s32
      %s34 = sshll.u32 %s1, 4
      %s35 = int_to_ptr.hbm [resolvable:$true] %s34
      %37 = dma.vmem_to_hbm [thread:$0]  %s33, 128, %s35, [#allocation4]
    $region13: #{tpu_custom_call.1} parent=1 // pred_fallthru
      _
    // Predicated region
    $region14: #{tpu_custom_call.1} parent=1 // pred_check
      _
    $region15: #{tpu_custom_call.1} parent=1 // pred_check_branch
      %39 = sbr.rel (0) target = $region17
    $region16: #{tpu_custom_call.1} parent=1 // pred_region
      %41 = dma.done [#allocation4], 128
    $region17: #{tpu_custom_call.1} parent=1 // pred_fallthru
      _
    %42 = vsyncpa [#allocation3], 1
    %43 = vsyncpa [#allocation4], 1

</llo_original>
